<compile_context>
chip_gen: v6e
topology: v6e:2x2x1
jax: 0.10.0
libtpu: 0.0.40
codegen_flags: <defaults>
</compile_context>

<pallas_src>
import math

import jax
import jax.numpy as jnp
from jax.experimental import pallas as pl
from jax.experimental.pallas import tpu as pltpu


# ~2 MiB row tiles: in+out double buffering stays ~8 MiB, inside every
# generation's scoped-VMEM default, and still in the ~85% HBM-roofline regime.
_TILE_BYTES = 2 << 20


def _forecast_kernel(x_ref, o_ref):
    """Forecast stage on one lane-dense tile.

    With forecast_depth=0 the Sequential holds zero blocks, so the tile passes
    through unchanged.  This flattened layout is only valid because the empty
    stage is pointwise; see the TODO(synk) at the top for the real-block path.
    """
    o_ref[...] = x_ref[...]


def _sublane_pack(dtype):
    """Native sublane packing: 8 rows for 32-bit, 16 for bf16, 32 for 8-bit."""
    itemsize = jnp.dtype(dtype).itemsize
    return max(8, 32 // itemsize)


def _choose_layout(total_elems, dtype):
    """Pick a lane-dense 2D view [rows, lane] and a pack-aligned row-tile size.

    Returns (rows, lane, block_rows) or None if no lane in {2048..128} yields a
    pack-aligned row count (caller then uses the row-tiled ragged fallback).
    """
    itemsize = jnp.dtype(dtype).itemsize
    pack = _sublane_pack(dtype)
    for lane in (2048, 1024, 512, 256, 128):
        if total_elems % lane:
            continue
        rows = total_elems // lane
        if rows % pack:
            continue  # try a narrower lane so rows stays pack-aligned

        # Cap by the ~2 MiB tile budget; when there is more than one tile's
        # worth of rows, also cap at rows//2 so the grid has >= 2 steps
        # (pipelining + both v7x TensorCores get work).
        cap = min(rows, max(pack, _TILE_BYTES // (lane * itemsize)))
        if rows > pack:
            cap = min(cap, rows // 2)
        cap -= cap % pack
        if cap < pack:
            cap = pack

        block_rows = None
        first_divisor = None
        for r in range(cap, 0, -pack):
            if rows % r:
                continue
            if first_divisor is None:
                first_divisor = r
            if (rows // r) % 2 == 0:  # prefer an even step count (2-TC sharding)
                block_rows = r
                break
        if block_rows is None:
            block_rows = first_divisor
        if block_rows is None:
            # No pack-aligned divisor under the cap: only accept a single
            # full-extent block if the whole array fits the tile budget.
            if rows * lane * itemsize <= _TILE_BYTES:
                block_rows = rows
            else:
                continue
        return rows, lane, block_rows
    return None


def _pallas_row_tiled_fallback(x, cost):
    """Ragged element count: tile leading dims in pack multiples, full last dim.

    Never stages the whole tensor as one VMEM block unless it fits the ~2 MiB
    tile budget; cdiv grid masks the partial last block.
    """
    itemsize = jnp.dtype(x.dtype).itemsize
    pack = _sublane_pack(x.dtype)
    last = x.shape[-1]
    lead = math.prod(x.shape[:-1])
    x2 = x.reshape(lead, last)  # contiguous reshape: free, no transpose copy

    block_rows = max(pack, (_TILE_BYTES // max(1, last * itemsize)) // pack * pack)
    if lead <= block_rows:
        block_rows = lead  # tiny array: single full-extent block (layout-legal)
    else:
        # >= 2 grid steps so the pipeline / 2-TC sharding has work to overlap
        half = max(pack, (lead // 2) // pack * pack)
        block_rows = min(block_rows, half)

    y2 = pl.pallas_call(
        _forecast_kernel,
        out_shape=jax.ShapeDtypeStruct((lead, last), x.dtype),
        grid=(pl.cdiv(lead, block_rows),),
        in_specs=[pl.BlockSpec((block_rows, last), lambda i: (i, 0))],
        out_specs=pl.BlockSpec((block_rows, last), lambda i: (i, 0)),
        compiler_params=pltpu.CompilerParams(
            dimension_semantics=("parallel",),
        ),
        cost_estimate=cost,
    )(x2)
    return y2.reshape(x.shape)


def _pallas_forecast_identity(x):
    """Run the (empty) forecast stage through Pallas on a lane-dense view."""
    total = math.prod(x.shape)
    itemsize = jnp.dtype(x.dtype).itemsize
    cost = pl.CostEstimate(
        flops=0, transcendentals=0, bytes_accessed=2 * total * itemsize
    )

    layout = _choose_layout(total, x.dtype)
    if layout is None:
        return _pallas_row_tiled_fallback(x, cost)

    rows, lane, block_rows = layout
    x2 = x.reshape(rows, lane)  # contiguous reshape: free view, no transpose copy
    y2 = pl.pallas_call(
        _forecast_kernel,
        out_shape=jax.ShapeDtypeStruct((rows, lane), x.dtype),
        grid=(rows // block_rows,),
        in_specs=[pl.BlockSpec((block_rows, lane), lambda i: (i, 0))],
        out_specs=pl.BlockSpec((block_rows, lane), lambda i: (i, 0)),
        compiler_params=pltpu.CompilerParams(
            dimension_semantics=("parallel",),  # shards row tiles across v7x's 2 TCs
        ),
        cost_estimate=cost,
    )(x2)
    return y2.reshape(x.shape)


def nat_cast_latent_forward(x, forecast_depth=0, use_pallas_forecast=False):
    """Forward pass of NATCastLatent.  x: [B, C, 1, H, W] -> [B, C, 1, H, W]."""
    assert forecast_depth == 0, "only the default (empty) forecast stage is implemented"
    B, C, T, H, W = x.shape
    assert T == 1, "time axis must be singleton (torch squeeze(2) requires T == 1)"

    if not use_pallas_forecast:
        # Highest-value path: squeeze(2).permute(0,2,3,1), an empty block
        # stack, and permute(0,3,1,2).unsqueeze(2) compose to an exact
        # identity, so skip all layout copies and the kernel entirely.
        return x

    # Pallas forecast-stage path (layout/tiling demonstration for the empty,
    # pointwise stage only).
    return _pallas_forecast_identity(x)


if __name__ == "__main__":
    key = jax.random.PRNGKey(0)

    # --- Default fast path: forecast_depth=0 short-circuits to the input. ---
    x_small = jax.random.normal(key, (2, 32, 1, 16, 16), dtype=jnp.float32)
    y_fast = nat_cast_latent_forward(x_small, forecast_depth=0)
    jax.block_until_ready(y_fast)
    assert y_fast.shape == x_small.shape
    assert bool(jnp.array_equal(y_fast, x_small)), "fast path must be an identity"

    # --- Pallas path, f32: lane=2048, pack-aligned rows, 2-step grid. ---
    k1, k2 = jax.random.split(key)
    x_f32 = jax.random.normal(k1, (2, 32, 1, 32, 32), dtype=jnp.float32)
    y_f32 = nat_cast_latent_forward(x_f32, forecast_depth=0, use_pallas_forecast=True)
    jax.block_until_ready(y_f32)
    assert y_f32.shape == x_f32.shape
    assert bool(jnp.array_equal(y_f32, x_f32)), "Pallas f32 path must match identity"

    # --- Pallas path, bf16 with a ragged element count: exercises the
    #     row-tiled fallback and the 16-row sublane pack. ---
    x_bf16 = jax.random.normal(k2, (1, 48, 1, 24, 24), dtype=jnp.bfloat16)
    y_bf16 = nat_cast_latent_forward(x_bf16, forecast_depth=0, use_pallas_forecast=True)
    jax.block_until_ready(y_bf16)
    assert y_bf16.shape == x_bf16.shape
    assert bool(jnp.array_equal(y_bf16, x_bf16)), "Pallas bf16 path must match identity"

    print("KERNEL_OK")
</pallas_src>

<mosaic_0001>
module attributes {stable_mosaic.version = 11 : i64} {
  func.func @_forecast_kernel(%arg0: i32, %arg1: memref<16x2048xf32, #tpu.memory_space<vmem>>, %arg2: memref<16x2048xf32, #tpu.memory_space<vmem>>) attributes {dimension_semantics = [#tpu.dimension_semantics<parallel>], iteration_bounds = array<i64: 2>, scalar_prefetch = 0 : i64, scratch_operands = 0 : i64, tpu.core_type = #tpu.core_type<tc>, window_params = [{transform_indices = @transform_0, window_bounds = array<i64: 16, 2048>}, {transform_indices = @transform_1, window_bounds = array<i64: 16, 2048>}]} {
    %c0 = arith.constant 0 : index
    %c0_0 = arith.constant 0 : index
    %0 = vector.load %arg1[%c0, %c0_0] : memref<16x2048xf32, #tpu.memory_space<vmem>>, vector<16x2048xf32>
    %c0_1 = arith.constant 0 : index
    %c0_2 = arith.constant 0 : index
    %1 = vector.load %arg2[%c0_1, %c0_2] : memref<16x2048xf32, #tpu.memory_space<vmem>>, vector<16x2048xf32>
    tpu.vector_store %arg2[%c0_1, %c0_2], %0 {strides = array<i32>} : memref<16x2048xf32, #tpu.memory_space<vmem>>, vector<16x2048xf32>,
    return
  }
  func.func @transform_0(%arg0: i32) -> (i32, i32) {
    %c0_i32 = arith.constant 0 : i32
    %c0_i32_0 = arith.constant 0 : i32
    return %arg0, %c0_i32 : i32, i32
  }
  func.func @transform_1(%arg0: i32) -> (i32, i32) {
    %c0_i32 = arith.constant 0 : i32
    %c0_i32_0 = arith.constant 0 : i32
    return %arg0, %c0_i32 : i32, i32
  }
}

</mosaic_0001>

<llo_original>
// kernel: tpu_custom_call.1
$region0: #{tpu_custom_call.1}
  #allocation0 [shape = 'u32[]', space=smem, size = 0x4, offset = 0x4, fixed_abs, tag = 'smem constant byte address 0x4 - core index']
  #allocation1 [shape = 'u32[144,128]{1,0:T(1,128)}', space=vmem, size = 0x12000, scoped, tag = 'internal scratch']
  %s0 = inlined_call_operand.hbm [shape: f32[32,2048], index: 0, kind: input, shape index: {}]
  %s1 = inlined_call_operand.hbm [shape: f32[32,2048], index: 1, kind: output, shape index: {}]
  %s2 = sld [smem:[#allocation0]]
  $region41: #{tpu_custom_call.1} parent=0
    _
  %s4 = ssub.s32 1, %s2
  %s5 = scalar_select 0, %s4, %s2
  $region1: #{tpu_custom_call.1} parent=0
    #allocation2 [shape = 'u8[262144]{0}', space=vmem, size = 0x40000, scoped, tag = 'input window, operand 0']
    #allocation3 [shape = 's32[2]{0}', space=sflag, size = 0x8, scoped, tag = 'scoped memory for tpu_custom_call.1']
    #allocation4 [shape = 's32[2]{0}', space=sflag, size = 0x8, scoped, tag = 'scoped memory for tpu_custom_call.1']
    #allocation5 [shape = 'u8[262144]{0}', space=vmem, size = 0x40000, scoped, tag = 'output window, operand 0']
    %6 = vsyncpa [#allocation3], 0
    %s7 = scalar_lea.sflag [#allocation3], 1
    %8 = vsyncpa %s7, 0
    %9 = vsyncpa [#allocation4], 0
    %s10 = scalar_lea.sflag [#allocation4], 1
    %11 = vsyncpa %s10, 0
    loop: start=0, step=1, limit=4
    $region2: #{tpu_custom_call.1} parent=1 // loop_pre_header
      _
    $region3: #{tpu_custom_call.1} parent=1 // loop_header
      %s13 = sphi 0, %s17
      %p14 = scmp.ge.s32.totalorder %s13, 4
      %s23 = sphi 0, %s25
      %s26 = sphi 0, %s23
      %s27 = sphi 0, %s26
      %s43 = sphi 0, %s27
      %s49 = sphi 0, %s51
      %s52 = sphi 0, %s49
      %s53 = sphi 0, %s52
      %s69 = sphi 0, %s53
    $region4: #{tpu_custom_call.1} parent=1 // loop_header_branch
      %16 = sbr.rel (%p14) target = $region8
    $region5: #{tpu_custom_call.1} parent=1 // loop_body
      %s18 = ssub.s32 %s13, 1
      %s19 = ssub.s32 %s13, 2
      %s20 = sadd.s32 %s13, 1
      %s21 = ssub.s32 %s13, %s20
      %p22 = scmp.eq.s32.totalorder %s21, 0
      %s24 = sadd.s32 %s23, 1
      %s25 = scalar_select %p22, %s23, %s24
      %p28 = pneg %p22
      %p29 = scmp.eq.s32.totalorder %s13, 1
      %p30 = por %p28, %p29
      %p31 = scmp.ne.s32.totalorder %s23, %s26
      %p32 = scmp.eq.s32.totalorder %s13, 0
      %p33 = por %p31, %p32
      %p34 = scmp.ne.s32.totalorder %s23, %s26
      %p35 = scmp.eq.s32.totalorder %s18, 1
      %p36 = por %p34, %p35
      %p37 = scmp.ne.s32.totalorder %s26, %s27
      %p38 = scmp.eq.s32.totalorder %s18, 0
      %p39 = por %p37, %p38
      %p40 = scmp.ne.s32.totalorder %s26, %s27
      %p41 = scmp.eq.s32.totalorder %s19, 1
      %p42 = por %p40, %p41
      %p44 = scmp.ne.s32.totalorder %s27, %s43
      %p45 = scmp.eq.s32.totalorder %s19, 0
      %p46 = por %p44, %p45
      %s47 = ssub.s32 %s13, %s20
      %p48 = scmp.eq.s32.totalorder %s47, 0
      %s50 = sadd.s32 %s49, 1
      %s51 = scalar_select %p48, %s49, %s50
      %p54 = pneg %p48
      %p55 = scmp.eq.s32.totalorder %s13, 1
      %p56 = por %p54, %p55
      %p57 = scmp.ne.s32.totalorder %s49, %s52
      %p58 = scmp.eq.s32.totalorder %s13, 0
      %p59 = por %p57, %p58
      %p60 = scmp.ne.s32.totalorder %s49, %s52
      %p61 = scmp.eq.s32.totalorder %s18, 1
      %p62 = por %p60, %p61
      %p63 = scmp.ne.s32.totalorder %s52, %s53
      %p64 = scmp.eq.s32.totalorder %s18, 0
      %p65 = por %p63, %p64
      %p66 = scmp.ne.s32.totalorder %s52, %s53
      %p67 = scmp.eq.s32.totalorder %s19, 1
      %p68 = por %p66, %p67
      %p70 = scmp.ne.s32.totalorder %s53, %s69
      %p71 = scmp.eq.s32.totalorder %s19, 0
      %p72 = por %p70, %p71
      %p73 = scmp.le.s32.totalorder 1, %s13
      %p74 = scmp.lt.s32.totalorder %s13, 3
      %p75 = pnand %p73, %p74
      %p76 = pneg %p75
      // Predicated region
      $region9: #{tpu_custom_call.1} parent=5 // pred_check
        _
      $region10: #{tpu_custom_call.1} parent=5 // pred_check_branch
        %78 = sbr.rel (%p75) target = $region12
      $region11: #{tpu_custom_call.1} parent=5 // pred_region
        %s79 = ssub.s32 %s13, 1
      $region12: #{tpu_custom_call.1} parent=5 // pred_fallthru
        _
      %p80 = scmp.lt.s32.totalorder %s13, 2
      // Predicated region
      $region13: #{tpu_custom_call.1} parent=5 // pred_check
        %p81 = pneg %p80
      $region14: #{tpu_custom_call.1} parent=5 // pred_check_branch
        %83 = sbr.rel (%p81) target = $region16
      $region15: #{tpu_custom_call.1} parent=5 // pred_region
        // Predicated region
        $region17: #{tpu_custom_call.1} parent=15 // pred_check
          %p84 = pneg %p33
        $region18: #{tpu_custom_call.1} parent=15 // pred_check_branch
          %86 = sbr.rel (%p84) target = $region20
        $region19: #{tpu_custom_call.1} parent=15 // pred_region
          %s87 = sand.u32 %s23, 1
          %s88 = scalar_lea.sflag [#allocation3], %s87
          %s89 = sand.u32 %s23, 1
          %s90 = smul.addr %s89, 256
          %s91 = scalar_lea.vmem [#allocation2], %s90
          %s92 = smul.u32 2, %s13
          %s94 = ssub.s32 4096, 4096
          %95 = vsyncadd %s88, %s94
          %s96 = smul.addr %s92, 16
          %s97 = smul.addr %s96, 128
          %s98 = scalar_lea.hbm %s0, %s97
          %s99 = sshll.u32 %s91, 4
          %s100 = int_to_ptr.vmem [resolvable:$true] %s99
          %105 = dma.hbm_to_vmem [thread:$0]  %s98, 4096, %s100, %s88, 2048, 2048, 128
        $region20: #{tpu_custom_call.1} parent=15 // pred_fallthru
          _
      $region16: #{tpu_custom_call.1} parent=5 // pred_fallthru
        _
      %p106 = scmp.le.s32.totalorder 1, %s13
      %p107 = scmp.lt.s32.totalorder %s13, 3
      %p108 = pnand %p106, %p107
      %p109 = pneg %p108
      // Predicated region
      $region21: #{tpu_custom_call.1} parent=5 // pred_check
        _
      $region22: #{tpu_custom_call.1} parent=5 // pred_check_branch
        %111 = sbr.rel (%p108) target = $region24
      $region23: #{tpu_custom_call.1} parent=5 // pred_region
        %s112 = ssub.s32 %s13, 1
        %s113 = sand.u32 %s26, 1
        %s114 = scalar_lea.sflag [#allocation3], %s113
        %s115 = sand.u32 %s26, 1
        %s116 = smul.addr %s115, 256
        %s117 = scalar_lea.vmem [#allocation2], %s116
        // Predicated region
        $region25: #{tpu_custom_call.1} parent=23 // pred_check
          %p118 = pneg %p39
        $region26: #{tpu_custom_call.1} parent=23 // pred_check_branch
          %120 = sbr.rel (%p118) target = $region28
        $region27: #{tpu_custom_call.1} parent=23 // pred_region
          %121 = dma.done %s114, 4096
        $region28: #{tpu_custom_call.1} parent=23 // pred_fallthru
          _
        %s122 = sand.u32 %s26, 1
        %s123 = scalar_lea.sflag [#allocation3], %s122
        %s124 = sand.u32 %s26, 1
        %s125 = smul.addr %s124, 256
        %s126 = scalar_lea.vmem [#allocation2], %s125
        %p127 = pneg %p39
        %p128 = pneg %p36
        %p129 = pneg %p65
        %p130 = pneg %p62
        %s131 = sand.u32 %s52, 1
        %s132 = scalar_lea.sflag [#allocation4], %s131
        %s133 = sand.u32 %s52, 1
        %s134 = smul.addr %s133, 256
        %s135 = scalar_lea.vmem [#allocation5], %s134
        %s136 = smul.u32 2, %s18
        %s137 = smul.u32 2, %s18
        %v138 = vld [vmem:[%s117] sm:$0xff]
        %v139 = vld [vmem:[%s117 + $0x8] sm:$0xff]
        %v140 = vld [vmem:[%s117 + $0x10] sm:$0xff]
        %v141 = vld [vmem:[%s117 + $0x18] sm:$0xff]
        %v142 = vld [vmem:[%s117 + $0x20] sm:$0xff]
        %v143 = vld [vmem:[%s117 + $0x28] sm:$0xff]
        %v144 = vld [vmem:[%s117 + $0x30] sm:$0xff]
        %v145 = vld [vmem:[%s117 + $0x38] sm:$0xff]
        %v146 = vld [vmem:[%s117 + $0x40] sm:$0xff]
        %v147 = vld [vmem:[%s117 + $0x48] sm:$0xff]
        %v148 = vld [vmem:[%s117 + $0x50] sm:$0xff]
        %v149 = vld [vmem:[%s117 + $0x58] sm:$0xff]
        %v150 = vld [vmem:[%s117 + $0x60] sm:$0xff]
        %v151 = vld [vmem:[%s117 + $0x68] sm:$0xff]
        %v152 = vld [vmem:[%s117 + $0x70] sm:$0xff]
        %v153 = vld [vmem:[%s117 + $0x78] sm:$0xff]
        %v154 = vld [vmem:[%s117 + $0x80] sm:$0xff]
        %v155 = vld [vmem:[%s117 + $0x88] sm:$0xff]
        %v156 = vld [vmem:[%s117 + $0x90] sm:$0xff]
        %v157 = vld [vmem:[%s117 + $0x98] sm:$0xff]
        %v158 = vld [vmem:[%s117 + $0xa0] sm:$0xff]
        %v159 = vld [vmem:[%s117 + $0xa8] sm:$0xff]
        %v160 = vld [vmem:[%s117 + $0xb0] sm:$0xff]
        %v161 = vld [vmem:[%s117 + $0xb8] sm:$0xff]
        %v162 = vld [vmem:[%s117 + $0xc0] sm:$0xff]
        %v163 = vld [vmem:[%s117 + $0xc8] sm:$0xff]
        %v164 = vld [vmem:[%s117 + $0xd0] sm:$0xff]
        %v165 = vld [vmem:[%s117 + $0xd8] sm:$0xff]
        %v166 = vld [vmem:[%s117 + $0xe0] sm:$0xff]
        %v167 = vld [vmem:[%s117 + $0xe8] sm:$0xff]
        %v168 = vld [vmem:[%s117 + $0xf0] sm:$0xff]
        %v169 = vld [vmem:[%s117 + $0xf8] sm:$0xff]
        %170 = vst [vmem:[%s135] sm:$0xff] %v138
        %171 = vst [vmem:[%s135 + $0x8] sm:$0xff] %v139
        %172 = vst [vmem:[%s135 + $0x10] sm:$0xff] %v140
        %173 = vst [vmem:[%s135 + $0x18] sm:$0xff] %v141
        %174 = vst [vmem:[%s135 + $0x20] sm:$0xff] %v142
        %175 = vst [vmem:[%s135 + $0x28] sm:$0xff] %v143
        %176 = vst [vmem:[%s135 + $0x30] sm:$0xff] %v144
        %177 = vst [vmem:[%s135 + $0x38] sm:$0xff] %v145
        %178 = vst [vmem:[%s135 + $0x40] sm:$0xff] %v146
        %179 = vst [vmem:[%s135 + $0x48] sm:$0xff] %v147
        %180 = vst [vmem:[%s135 + $0x50] sm:$0xff] %v148
        %181 = vst [vmem:[%s135 + $0x58] sm:$0xff] %v149
        %182 = vst [vmem:[%s135 + $0x60] sm:$0xff] %v150
        %183 = vst [vmem:[%s135 + $0x68] sm:$0xff] %v151
        %184 = vst [vmem:[%s135 + $0x70] sm:$0xff] %v152
        %185 = vst [vmem:[%s135 + $0x78] sm:$0xff] %v153
        %186 = vst [vmem:[%s135 + $0x80] sm:$0xff] %v154
        %187 = vst [vmem:[%s135 + $0x88] sm:$0xff] %v155
        %188 = vst [vmem:[%s135 + $0x90] sm:$0xff] %v156
        %189 = vst [vmem:[%s135 + $0x98] sm:$0xff] %v157
        %190 = vst [vmem:[%s135 + $0xa0] sm:$0xff] %v158
        %191 = vst [vmem:[%s135 + $0xa8] sm:$0xff] %v159
        %192 = vst [vmem:[%s135 + $0xb0] sm:$0xff] %v160
        %193 = vst [vmem:[%s135 + $0xb8] sm:$0xff] %v161
        %194 = vst [vmem:[%s135 + $0xc0] sm:$0xff] %v162
        %195 = vst [vmem:[%s135 + $0xc8] sm:$0xff] %v163
        %196 = vst [vmem:[%s135 + $0xd0] sm:$0xff] %v164
        %197 = vst [vmem:[%s135 + $0xd8] sm:$0xff] %v165
        %198 = vst [vmem:[%s135 + $0xe0] sm:$0xff] %v166
        %199 = vst [vmem:[%s135 + $0xe8] sm:$0xff] %v167
        %200 = vst [vmem:[%s135 + $0xf0] sm:$0xff] %v168
        %201 = vst [vmem:[%s135 + $0xf8] sm:$0xff] %v169
        %s202 = sand.u32 %s52, 1
        %s203 = scalar_lea.sflag [#allocation4], %s202
        %s204 = sand.u32 %s52, 1
        %s205 = smul.addr %s204, 256
        %s206 = scalar_lea.vmem [#allocation5], %s205
        // Predicated region
        $region29: #{tpu_custom_call.1} parent=23 // pred_check
          %p207 = pneg %p62
        $region30: #{tpu_custom_call.1} parent=23 // pred_check_branch
          %209 = sbr.rel (%p207) target = $region32
        $region31: #{tpu_custom_call.1} parent=23 // pred_region
          %s210 = smul.u32 2, %s18
          %s212 = ssub.s32 4096, 4096
          %213 = vsyncadd %s203, %s212
          %s214 = smul.addr %s210, 16
          %s215 = smul.addr %s214, 128
          %s216 = scalar_lea.hbm %s1, %s215
          %s217 = sshll.u32 %s206, 4
          %s218 = int_to_ptr.vmem [resolvable:$true] %s217
          %223 = dma.vmem_to_hbm [thread:$0]  %s218, 4096, %s216, %s203, 2048, 2048, 128
        $region32: #{tpu_custom_call.1} parent=23 // pred_fallthru
          _
      $region24: #{tpu_custom_call.1} parent=5 // pred_fallthru
        _
      %p224 = scmp.le.s32.totalorder 2, %s13
      // Predicated region
      $region33: #{tpu_custom_call.1} parent=5 // pred_check
        %p225 = pneg %p224
      $region34: #{tpu_custom_call.1} parent=5 // pred_check_branch
        %227 = sbr.rel (%p225) target = $region36
      $region35: #{tpu_custom_call.1} parent=5 // pred_region
        %s228 = ssub.s32 %s13, 2
        // Predicated region
        $region37: #{tpu_custom_call.1} parent=35 // pred_check
          %p229 = pneg %p68
        $region38: #{tpu_custom_call.1} parent=35 // pred_check_branch
          %231 = sbr.rel (%p229) target = $region40
        $region39: #{tpu_custom_call.1} parent=35 // pred_region
          %s232 = sand.u32 %s53, 1
          %s233 = scalar_lea.sflag [#allocation4], %s232
          %s234 = sand.u32 %s53, 1
          %s235 = smul.addr %s234, 256
          %s236 = scalar_lea.vmem [#allocation5], %s235
          %237 = dma.done %s233, 4096
        $region40: #{tpu_custom_call.1} parent=35 // pred_fallthru
          _
      $region36: #{tpu_custom_call.1} parent=5 // pred_fallthru
        _
    $region6: #{tpu_custom_call.1} parent=1 // loop_footer
      %s17 = sadd.s32 1, %s13
    $region7: #{tpu_custom_call.1} parent=1 // loop_footer_branch
      %12 = sbr.rel target = $region3
    $region8: #{tpu_custom_call.1} parent=1 // loop_exit
      _
    %238 = vsyncpa [#allocation3], 1
    %s239 = scalar_lea.sflag [#allocation3], 1
    %240 = vsyncpa %s239, 1
    %241 = vsyncpa [#allocation4], 1
    %s242 = scalar_lea.sflag [#allocation4], 1
    %243 = vsyncpa %s242, 1

</llo_original>
